<compile_context>
chip_gen: v7x
topology: tpu7x:2x2x1
jax: 0.10.0
libtpu: 0.0.40
codegen_flags: <defaults>
</compile_context>

<pallas_src>
import jax
import jax.numpy as jnp
from jax.experimental import pallas as pl
from jax.experimental.pallas import tpu as pltpu


def _round_up(x, m):
    return ((x + m - 1) // m) * m


def _cdiv(a, b):
    return -(-a // b)


def _device_info():
    """Best-effort TPU generation / VMEM capacity query (safe fallbacks)."""
    kind = ""
    try:
        kind = jax.devices()[0].device_kind.lower()
    except Exception:
        pass
    if "v7" in kind:
        gen = "v7x"
    elif "v6" in kind:
        gen = "v6e"
    elif "v5" in kind:
        gen = "v5e"
    else:
        gen = "unknown"
    vmem_cap = None
    try:
        vmem_cap = int(pltpu.get_tpu_info().vmem_capacity_bytes)
    except Exception:
        vmem_cap = None
    if vmem_cap is None or vmem_cap <= 0:
        # Conservative (v7x-sized) default when we cannot query.
        vmem_cap = {"v6e": 128, "v5e": 128, "v7x": 64}.get(gen, 64) << 20
    two_core = gen in ("v7x", "unknown")   # v5e/v6e are single-TensorCore chips
    return gen, vmem_cap, two_core


def _plan(B, N, F, E, out_itemsize, gen, vmem_cap, two_core):
    """Pick (tm, tk, padded dims, feat residency, vmem limit) per chip generation."""
    c_bytes = 2  # bf16 operands
    F_pad = _round_up(F, 128)
    E_pad = _round_up(E, 128)
    N128 = _round_up(N, 128)

    B8 = _round_up(B, 8)
    tm_max = 256 if (gen == "v6e" and B8 >= 256) else 128
    tk_max = 1024 if gen == "v6e" else 512

    tm = min(tm_max, B8)
    # v7x: make sure the "parallel" batch axis has >= 2 tiles to feed both cores.
    if two_core and B >= 16 and _cdiv(B, tm) == 1:
        tm = min(tm, _round_up(_cdiv(B, 2), 8))

    budget = int(vmem_cap * 0.6)

    def est(tm_, tk_, resident):
        w_b = F_pad * E_pad * c_bytes                  # Buffered(1): one copy
        bias_b = E_pad * 4
        acc_b = tm_ * F_pad * 4                        # f32 accumulator scratch
        out_b = 2 * tm_ * E_pad * out_itemsize
        adj_b = 2 * tm_ * tk_ * c_bytes
        feat_b = (N128 * F_pad * c_bytes) if resident else (2 * tk_ * F_pad * c_bytes)
        return w_b + bias_b + acc_b + out_b + adj_b + feat_b

    # Prefer keeping feat fully resident in VMEM (loaded once for the whole grid).
    if est(tm, N128, True) <= budget:
        resident, tk, N_pad = True, N128, N128
    else:
        resident = False
        cands = sorted({min(tk_max, N128), 512, 256, 128}, reverse=True)
        cands = [c for c in cands if c <= N128] or [128]
        # Minimize reduction-tail padding; tie-break toward the largest tile.
        tk = min(cands, key=lambda c: (_round_up(N, c), -c))
        while est(tm, tk, False) > budget and (tm > 8 or tk > 128):
            if tk > 128:
                tk = max(128, tk // 2)
            else:
                tm = max(8, _round_up(tm // 2, 8))
        N_pad = _round_up(N, tk)
        # TODO(synk): add an F/E tiling path when F_pad*E_pad weights alone exceed the
        # VMEM budget (very large feature/embedding dims); compiler may spill there.

    B_pad = _round_up(B, tm)
    need = est(tm, tk, resident)
    vmem_limit = int(min(max(need * 2, 32 << 20), max(int(vmem_cap * 0.85), 32 << 20)))
    return tm, tk, B_pad, N_pad, F_pad, E_pad, resident, vmem_limit


def _make_kernel(f_chunk, n_f_chunks):
    """Grid = (batch_tiles, n_reduction_tiles); reduction axis last."""

    def kernel(adj_ref, feat_ref, w_ref, b_ref, out_ref, acc_ref):
        k = pl.program_id(1)

        # Zero the aggregation accumulator at the first reduction step.
        @pl.when(k == 0)
        def _():
            acc_ref[...] = jnp.zeros_like(acc_ref)

        # Aggregator partial sum: emb_tile += adj_tile @ feat_tile (MXU, f32 accum).
        acc_ref[...] += jnp.dot(adj_ref[...], feat_ref[...],
                                preferred_element_type=jnp.float32)

        # Last reduction step: fused (Linear + eval-BN) and tanh, single lane-dense
        # store.  Dropout is identity in eval mode.
        @pl.when(k == pl.num_programs(1) - 1)
        def _():
            if n_f_chunks == 1:
                h = jnp.dot(acc_ref[...].astype(w_ref.dtype), w_ref[...],
                            preferred_element_type=jnp.float32)
            else:
                # Chunk over F to avoid a full-width bf16 temporary next to the
                # f32 accumulator (VMEM pressure on 64 MiB parts).
                h = jnp.zeros(out_ref.shape, jnp.float32)
                for c in range(n_f_chunks):
                    sl = slice(c * f_chunk, (c + 1) * f_chunk)
                    h = h + jnp.dot(acc_ref[:, sl].astype(w_ref.dtype),
                                    w_ref[sl, :],
                                    preferred_element_type=jnp.float32)
            out_ref[...] = jnp.tanh(h + b_ref[...]).astype(out_ref.dtype)

    return kernel


def encoding_layer(adj, feat, w, b, gamma, beta, running_mean, running_var,
                   *, eps=1e-5, compute_dtype=jnp.bfloat16, out_dtype=jnp.bfloat16):
    """adj:[B,N] feat:[N,F] w:[F,E] b/gamma/beta/mean/var:[E] or [1,E] -> out:[B,E]."""
    B, N = adj.shape
    F = feat.shape[1]
    E = w.shape[1]

    as_row = lambda x: jnp.reshape(x, (1, -1)).astype(jnp.float32)
    b, gamma, beta, running_mean, running_var = map(
        as_row, (b, gamma, beta, running_mean, running_var))

    # ---- Fold eval-mode BatchNorm1d + Linear bias into an affine (W', b'). ----
    scale = gamma * jax.lax.rsqrt(running_var + jnp.float32(eps))     # [1, E]
    w_f = w.astype(jnp.float32) * scale                               # [F, E]
    b_f = (b - running_mean) * scale + beta                           # [1, E]

    # ---- Generation-aware tiling / VMEM budgeting. ----
    gen, vmem_cap, two_core = _device_info()
    out_itemsize = jnp.dtype(out_dtype).itemsize
    tm, tk, B_pad, N_pad, F_pad, E_pad, resident, vmem_limit = _plan(
        B, N, F, E, out_itemsize, gen, vmem_cap, two_core)

    # ---- Pad to MXU/lane-friendly shapes (zero padding is exact). ----
    pad2 = lambda x, r, c: jnp.pad(x, ((0, r - x.shape[0]), (0, c - x.shape[1])))
    adj_p = pad2(adj.astype(compute_dtype), B_pad, N_pad)
    feat_p = pad2(feat.astype(compute_dtype), N_pad, F_pad)
    w_p = pad2(w_f.astype(compute_dtype), F_pad, E_pad)
    b_p = pad2(b_f, 1, E_pad)

    n_b = B_pad // tm
    n_k = N_pad // tk
    grid = (n_b, n_k)

    # Epilogue F-chunking (only kicks in for very large F).
    if F_pad <= 2048:
        f_chunk = F_pad
    else:
        f_chunk = next(c for c in (1024, 512, 256, 128) if F_pad % c == 0)
    n_f_chunks = F_pad // f_chunk

    kernel = _make_kernel(f_chunk, n_f_chunks)

    c_itemsize = jnp.dtype(compute_dtype).itemsize
    feat_reads = 1 if resident else n_b   # feat re-streamed per batch tile if not resident
    cost = pl.CostEstimate(
        flops=int(2 * B_pad * N_pad * F_pad + 2 * B_pad * F_pad * E_pad),
        transcendentals=int(B_pad * E_pad),
        bytes_accessed=int(adj_p.size * c_itemsize
                           + feat_p.size * c_itemsize * feat_reads
                           + w_p.size * c_itemsize
                           + b_p.size * 4
                           + B_pad * E_pad * out_itemsize),
    )

    def run(use_pipeline_modes):
        def opt(kwargs):
            return kwargs if use_pipeline_modes else {}

        single_buf = opt({"pipeline_mode": pl.Buffered(1)})   # constant-index operands
        deep_adj = opt({"pipeline_mode": pl.Buffered(3)}) if (not resident and n_k >= 8) else {}

        if resident:
            # Whole feature matrix resident in VMEM; DMA'd once for the entire grid.
            feat_spec = pl.BlockSpec((N_pad, F_pad), lambda i, k: (0, 0), **single_buf)
        else:
            feat_spec = pl.BlockSpec((tk, F_pad), lambda i, k: (k, 0))

        in_specs = [
            pl.BlockSpec((tm, tk), lambda i, k: (i, k), **deep_adj),       # adj tile
            feat_spec,                                                     # feature tile
            pl.BlockSpec((F_pad, E_pad), lambda i, k: (0, 0), **single_buf),  # folded W
            pl.BlockSpec((1, E_pad), lambda i, k: (0, 0), **single_buf),      # folded b
        ]

        return pl.pallas_call(
            kernel,
            out_shape=jax.ShapeDtypeStruct((B_pad, E_pad), out_dtype),
            grid_spec=pltpu.PrefetchScalarGridSpec(
                num_scalar_prefetch=0,
                grid=grid,
                in_specs=in_specs,
                out_specs=pl.BlockSpec((tm, E_pad), lambda i, k: (i, 0)),
                scratch_shapes=[pltpu.VMEM((tm, F_pad), jnp.float32)],  # emb accumulator
            ),
            compiler_params=pltpu.CompilerParams(
                dimension_semantics=("parallel", "arbitrary"),
                vmem_limit_bytes=vmem_limit),
            cost_estimate=cost,
        )(adj_p, feat_p, w_p, b_p)

    try:
        out_padded = jax.block_until_ready(run(True))
    except Exception:
        # pipeline_mode hints are advisory; fall back to default double buffering.
        out_padded = run(False)

    return out_padded[:B, :E]


if __name__ == "__main__":
    # Small shapes consistent with the module:
    #   batch (len(node_list)) = 8, num_nodes = 64,
    #   feature_dim = emb_input_dim = 32, emb_dim = 32.
    B, N, F, E = 8, 64, 32, 32

    key = jax.random.PRNGKey(0)
    k_feat, k_adj, k_w, k_b, k_g, k_bt, k_rm, k_rv = jax.random.split(key, 8)

    # Node features and a row-normalized "neighbor" matrix (mean aggregator).
    feat = jax.random.normal(k_feat, (N, F), dtype=jnp.float32)
    raw = jax.random.uniform(k_adj, (B, N), dtype=jnp.float32)
    adj = raw / jnp.sum(raw, axis=1, keepdims=True)

    # Deterministic parameters (Linear + BatchNorm1d of emb_dim).
    w = jax.random.normal(k_w, (F, E), dtype=jnp.float32) * (1.0 / jnp.sqrt(F))
    b = jax.random.normal(k_b, (1, E), dtype=jnp.float32) * 0.01
    gamma = jnp.ones((1, E), dtype=jnp.float32)
    beta = jnp.zeros((1, E), dtype=jnp.float32)
    running_mean = jax.random.normal(k_rm, (1, E), dtype=jnp.float32) * 0.1
    running_var = jax.random.uniform(k_rv, (1, E), dtype=jnp.float32,
                                     minval=0.5, maxval=1.5)

    out = encoding_layer(adj, feat, w, b, gamma, beta, running_mean, running_var)
    out = jax.block_until_ready(out)

    # Reference (plain JAX, f32); bf16 operands/output -> looser tolerance.
    emb_ref = adj @ feat
    h_ref = emb_ref @ w + b
    h_ref = (h_ref - running_mean) * jax.lax.rsqrt(running_var + 1e-5) * gamma + beta
    ref = jnp.tanh(h_ref)
    assert out.shape == (B, E)
    assert jnp.allclose(out.astype(jnp.float32), ref, atol=3e-2, rtol=3e-2)

    print("KERNEL_OK")
</pallas_src>

<mosaic_0001>
module attributes {stable_mosaic.version = 11 : i64} {
  func.func @kernel(%arg0: i32, %arg1: i32, %arg2: memref<8x128xbf16, #tpu.memory_space<vmem>>, %arg3: memref<128x128xbf16, #tpu.memory_space<vmem>>, %arg4: memref<128x128xbf16, #tpu.memory_space<vmem>>, %arg5: memref<1x128xf32, #tpu.memory_space<vmem>>, %arg6: memref<8x128xbf16, #tpu.memory_space<vmem>>, %arg7: memref<8x128xf32, #tpu.memory_space<vmem>>) attributes {dimension_semantics = [#tpu.dimension_semantics<parallel>, #tpu.dimension_semantics<arbitrary>], iteration_bounds = array<i64: 1, 1>, scalar_prefetch = 0 : i64, scratch_operands = 1 : i64, tpu.core_type = #tpu.core_type<tc>, window_params = [{transform_indices = @transform_0, window_bounds = array<i64: 8, 128>}, {pipeline_mode = #tpu.pipeline_mode<synchronous>, transform_indices = @transform_1, window_bounds = array<i64: 128, 128>}, {pipeline_mode = #tpu.pipeline_mode<synchronous>, transform_indices = @transform_2, window_bounds = array<i64: 128, 128>}, {pipeline_mode = #tpu.pipeline_mode<synchronous>, transform_indices = @transform_3, window_bounds = array<i64: 1, 128>}, {transform_indices = @transform_4, window_bounds = array<i64: 8, 128>}]} {
    %c0_i32 = arith.constant 0 : i32
    %0 = arith.cmpi eq, %arg1, %c0_i32 : i32
    %1 = arith.extui %0 : i1 to i32
    %c0_i32_0 = arith.constant 0 : i32
    %2 = arith.cmpi ne, %1, %c0_i32_0 : i32
    scf.if %2 {
      %cst_10 = arith.constant 0.000000e+00 : f32
      %12 = vector.broadcast %cst_10 : f32 to vector<8x128xf32>
      %c0_11 = arith.constant 0 : index
      %c0_12 = arith.constant 0 : index
      %13 = vector.load %arg7[%c0_11, %c0_12] : memref<8x128xf32, #tpu.memory_space<vmem>>, vector<8x128xf32>
      tpu.vector_store %arg7[%c0_11, %c0_12], %12 {strides = array<i32>} : memref<8x128xf32, #tpu.memory_space<vmem>>, vector<8x128xf32>,
    } else {
    }
    %c0 = arith.constant 0 : index
    %c0_1 = arith.constant 0 : index
    %3 = vector.load %arg7[%c0, %c0_1] : memref<8x128xf32, #tpu.memory_space<vmem>>, vector<8x128xf32>
    %c0_2 = arith.constant 0 : index
    %c0_3 = arith.constant 0 : index
    %4 = vector.load %arg2[%c0_2, %c0_3] : memref<8x128xbf16, #tpu.memory_space<vmem>>, vector<8x128xbf16>
    %c0_4 = arith.constant 0 : index
    %c0_5 = arith.constant 0 : index
    %5 = vector.load %arg3[%c0_4, %c0_5] : memref<128x128xbf16, #tpu.memory_space<vmem>>, vector<128x128xbf16>
    %cst = arith.constant dense<0.000000e+00> : vector<8x128xf32>
    %6 = tpu.matmul %4, %5, %cst {dimension_numbers = #tpu.dot_dimension_numbers<[1], [0], [0], [1], [0, 0, 1, 1], [], []>} : vector<8x128xbf16>, vector<128x128xbf16>, vector<8x128xf32> -> vector<8x128xf32>
    %7 = arith.addf %3, %6 : vector<8x128xf32>
    %c0_6 = arith.constant 0 : index
    %c0_7 = arith.constant 0 : index
    %8 = vector.load %arg7[%c0_6, %c0_7] : memref<8x128xf32, #tpu.memory_space<vmem>>, vector<8x128xf32>
    tpu.vector_store %arg7[%c0_6, %c0_7], %7 {strides = array<i32>} : memref<8x128xf32, #tpu.memory_space<vmem>>, vector<8x128xf32>,
    %c0_i32_8 = arith.constant 0 : i32
    %9 = arith.cmpi eq, %arg1, %c0_i32_8 : i32
    %10 = arith.extui %9 : i1 to i32
    %c0_i32_9 = arith.constant 0 : i32
    %11 = arith.cmpi ne, %10, %c0_i32_9 : i32
    scf.if %11 {
      %c0_10 = arith.constant 0 : index
      %c0_11 = arith.constant 0 : index
      %12 = vector.load %arg7[%c0_10, %c0_11] : memref<8x128xf32, #tpu.memory_space<vmem>>, vector<8x128xf32>
      %13 = arith.truncf %12 : vector<8x128xf32> to vector<8x128xbf16>
      %c0_12 = arith.constant 0 : index
      %c0_13 = arith.constant 0 : index
      %14 = vector.load %arg4[%c0_12, %c0_13] : memref<128x128xbf16, #tpu.memory_space<vmem>>, vector<128x128xbf16>
      %cst_14 = arith.constant dense<0.000000e+00> : vector<8x128xf32>
      %15 = tpu.matmul %13, %14, %cst_14 {dimension_numbers = #tpu.dot_dimension_numbers<[1], [0], [0], [1], [0, 0, 1, 1], [], []>} : vector<8x128xbf16>, vector<128x128xbf16>, vector<8x128xf32> -> vector<8x128xf32>
      %c0_15 = arith.constant 0 : index
      %c0_16 = arith.constant 0 : index
      %16 = vector.load %arg5[%c0_15, %c0_16] : memref<1x128xf32, #tpu.memory_space<vmem>>, vector<1x128xf32>
      %17 = vector.broadcast %16 : vector<1x128xf32> to vector<8x128xf32>
      %18 = arith.addf %15, %17 : vector<8x128xf32>
      %19 = math.tanh %18 : vector<8x128xf32>
      %20 = arith.truncf %19 : vector<8x128xf32> to vector<8x128xbf16>
      %c0_17 = arith.constant 0 : index
      %c0_18 = arith.constant 0 : index
      %21 = vector.load %arg6[%c0_17, %c0_18] : memref<8x128xbf16, #tpu.memory_space<vmem>>, vector<8x128xbf16>
      tpu.vector_store %arg6[%c0_17, %c0_18], %20 {strides = array<i32>} : memref<8x128xbf16, #tpu.memory_space<vmem>>, vector<8x128xbf16>,
    } else {
    }
    return
  }
  func.func @transform_0(%arg0: i32, %arg1: i32) -> (i32, i32) {
    %c0_i32 = arith.constant 0 : i32
    return %arg0, %arg1 : i32, i32
  }
  func.func @transform_1(%arg0: i32, %arg1: i32) -> (i32, i32) {
    %c0_i32 = arith.constant 0 : i32
    %c0_i32_0 = arith.constant 0 : i32
    %c0_i32_1 = arith.constant 0 : i32
    return %c0_i32, %c0_i32_0 : i32, i32
  }
  func.func @transform_2(%arg0: i32, %arg1: i32) -> (i32, i32) {
    %c0_i32 = arith.constant 0 : i32
    %c0_i32_0 = arith.constant 0 : i32
    %c0_i32_1 = arith.constant 0 : i32
    return %c0_i32, %c0_i32_0 : i32, i32
  }
  func.func @transform_3(%arg0: i32, %arg1: i32) -> (i32, i32) {
    %c0_i32 = arith.constant 0 : i32
    %c0_i32_0 = arith.constant 0 : i32
    %c0_i32_1 = arith.constant 0 : i32
    return %c0_i32, %c0_i32_0 : i32, i32
  }
  func.func @transform_4(%arg0: i32, %arg1: i32) -> (i32, i32) {
    %c0_i32 = arith.constant 0 : i32
    %c0_i32_0 = arith.constant 0 : i32
    return %arg0, %c0_i32 : i32, i32
  }
}

module attributes {stable_mosaic.version = 11 : i64} {
  func.func @kernel(%arg0: i32, %arg1: i32, %arg2: memref<8x128xbf16, #tpu.memory_space<vmem>>, %arg3: memref<128x128xbf16, #tpu.memory_space<vmem>>, %arg4: memref<128x128xbf16, #tpu.memory_space<vmem>>, %arg5: memref<1x128xf32, #tpu.memory_space<vmem>>, %arg6: memref<8x128xbf16, #tpu.memory_space<vmem>>, %arg7: memref<8x128xf32, #tpu.memory_space<vmem>>) attributes {dimension_semantics = [#tpu.dimension_semantics<parallel>, #tpu.dimension_semantics<arbitrary>], iteration_bounds = array<i64: 1, 1>, scalar_prefetch = 0 : i64, scratch_operands = 1 : i64, tpu.core_type = #tpu.core_type<tc>, window_params = [{transform_indices = @transform_0, window_bounds = array<i64: 8, 128>}, {pipeline_mode = #tpu.pipeline_mode<synchronous>, transform_indices = @transform_1, window_bounds = array<i64: 128, 128>}, {pipeline_mode = #tpu.pipeline_mode<synchronous>, transform_indices = @transform_2, window_bounds = array<i64: 128, 128>}, {pipeline_mode = #tpu.pipeline_mode<synchronous>, transform_indices = @transform_3, window_bounds = array<i64: 1, 128>}, {transform_indices = @transform_4, window_bounds = array<i64: 8, 128>}]} {
    %c0_i32 = arith.constant 0 : i32
    %0 = arith.cmpi eq, %arg1, %c0_i32 : i32
    %1 = arith.extui %0 : i1 to i32
    %c0_i32_0 = arith.constant 0 : i32
    %2 = arith.cmpi ne, %1, %c0_i32_0 : i32
    scf.if %2 {
      %cst_10 = arith.constant 0.000000e+00 : f32
      %12 = vector.broadcast %cst_10 : f32 to vector<8x128xf32>
      %c0_11 = arith.constant 0 : index
      %c0_12 = arith.constant 0 : index
      %13 = vector.load %arg7[%c0_11, %c0_12] : memref<8x128xf32, #tpu.memory_space<vmem>>, vector<8x128xf32>
      tpu.vector_store %arg7[%c0_11, %c0_12], %12 {strides = array<i32>} : memref<8x128xf32, #tpu.memory_space<vmem>>, vector<8x128xf32>,
    } else {
    }
    %c0 = arith.constant 0 : index
    %c0_1 = arith.constant 0 : index
    %3 = vector.load %arg7[%c0, %c0_1] : memref<8x128xf32, #tpu.memory_space<vmem>>, vector<8x128xf32>
    %c0_2 = arith.constant 0 : index
    %c0_3 = arith.constant 0 : index
    %4 = vector.load %arg2[%c0_2, %c0_3] : memref<8x128xbf16, #tpu.memory_space<vmem>>, vector<8x128xbf16>
    %c0_4 = arith.constant 0 : index
    %c0_5 = arith.constant 0 : index
    %5 = vector.load %arg3[%c0_4, %c0_5] : memref<128x128xbf16, #tpu.memory_space<vmem>>, vector<128x128xbf16>
    %cst = arith.constant dense<0.000000e+00> : vector<8x128xf32>
    %6 = tpu.matmul %4, %5, %cst {dimension_numbers = #tpu.dot_dimension_numbers<[1], [0], [0], [1], [0, 0, 1, 1], [], []>} : vector<8x128xbf16>, vector<128x128xbf16>, vector<8x128xf32> -> vector<8x128xf32>
    %7 = arith.addf %3, %6 : vector<8x128xf32>
    %c0_6 = arith.constant 0 : index
    %c0_7 = arith.constant 0 : index
    %8 = vector.load %arg7[%c0_6, %c0_7] : memref<8x128xf32, #tpu.memory_space<vmem>>, vector<8x128xf32>
    tpu.vector_store %arg7[%c0_6, %c0_7], %7 {strides = array<i32>} : memref<8x128xf32, #tpu.memory_space<vmem>>, vector<8x128xf32>,
    %c0_i32_8 = arith.constant 0 : i32
    %9 = arith.cmpi eq, %arg1, %c0_i32_8 : i32
    %10 = arith.extui %9 : i1 to i32
    %c0_i32_9 = arith.constant 0 : i32
    %11 = arith.cmpi ne, %10, %c0_i32_9 : i32
    scf.if %11 {
      %c0_10 = arith.constant 0 : index
      %c0_11 = arith.constant 0 : index
      %12 = vector.load %arg7[%c0_10, %c0_11] : memref<8x128xf32, #tpu.memory_space<vmem>>, vector<8x128xf32>
      %13 = arith.truncf %12 : vector<8x128xf32> to vector<8x128xbf16>
      %c0_12 = arith.constant 0 : index
      %c0_13 = arith.constant 0 : index
      %14 = vector.load %arg4[%c0_12, %c0_13] : memref<128x128xbf16, #tpu.memory_space<vmem>>, vector<128x128xbf16>
      %cst_14 = arith.constant dense<0.000000e+00> : vector<8x128xf32>
      %15 = tpu.matmul %13, %14, %cst_14 {dimension_numbers = #tpu.dot_dimension_numbers<[1], [0], [0], [1], [0, 0, 1, 1], [], []>} : vector<8x128xbf16>, vector<128x128xbf16>, vector<8x128xf32> -> vector<8x128xf32>
      %c0_15 = arith.constant 0 : index
      %c0_16 = arith.constant 0 : index
      %16 = vector.load %arg5[%c0_15, %c0_16] : memref<1x128xf32, #tpu.memory_space<vmem>>, vector<1x128xf32>
      %17 = vector.broadcast %16 : vector<1x128xf32> to vector<8x128xf32>
      %18 = arith.addf %15, %17 : vector<8x128xf32>
      %19 = math.tanh %18 : vector<8x128xf32>
      %20 = arith.truncf %19 : vector<8x128xf32> to vector<8x128xbf16>
      %c0_17 = arith.constant 0 : index
      %c0_18 = arith.constant 0 : index
      %21 = vector.load %arg6[%c0_17, %c0_18] : memref<8x128xbf16, #tpu.memory_space<vmem>>, vector<8x128xbf16>
      tpu.vector_store %arg6[%c0_17, %c0_18], %20 {strides = array<i32>} : memref<8x128xbf16, #tpu.memory_space<vmem>>, vector<8x128xbf16>,
    } else {
    }
    return
  }
  func.func @transform_0(%arg0: i32, %arg1: i32) -> (i32, i32) {
    %c0_i32 = arith.constant 0 : i32
    return %arg0, %arg1 : i32, i32
  }
  func.func @transform_1(%arg0: i32, %arg1: i32) -> (i32, i32) {
    %c0_i32 = arith.constant 0 : i32
    %c0_i32_0 = arith.constant 0 : i32
    %c0_i32_1 = arith.constant 0 : i32
    return %c0_i32, %c0_i32_0 : i32, i32
  }
  func.func @transform_2(%arg0: i32, %arg1: i32) -> (i32, i32) {
    %c0_i32 = arith.constant 0 : i32
    %c0_i32_0 = arith.constant 0 : i32
    %c0_i32_1 = arith.constant 0 : i32
    return %c0_i32, %c0_i32_0 : i32, i32
  }
  func.func @transform_3(%arg0: i32, %arg1: i32) -> (i32, i32) {
    %c0_i32 = arith.constant 0 : i32
    %c0_i32_0 = arith.constant 0 : i32
    %c0_i32_1 = arith.constant 0 : i32
    return %c0_i32, %c0_i32_0 : i32, i32
  }
  func.func @transform_4(%arg0: i32, %arg1: i32) -> (i32, i32) {
    %c0_i32 = arith.constant 0 : i32
    %c0_i32_0 = arith.constant 0 : i32
    return %arg0, %c0_i32 : i32, i32
  }
}

</mosaic_0001>

<llo_original>
// kernel: tpu_custom_call.1
$region0: #{tpu_custom_call.1}
  #allocation0 [shape = 'u32[]', space=smem, size = 0x4, offset = 0x4, fixed_abs, tag = 'smem constant byte address 0x4 - core index']
  #allocation1 [shape = 'u32[144,128]{1,0:T(1,128)}', space=vmem, size = 0x12000, scoped, tag = 'internal scratch']
  #allocation2 [shape = 'f32[8,128]{1,0:T(8,128)}', space=vmem, size = 0x1000, scoped, tag = 'scratch operand']
  %s0 = inlined_call_operand.hbm [shape: bf16[8,128], index: 0, kind: input, shape index: {}]
  %s1 = inlined_call_operand.hbm [shape: bf16[128,128], index: 1, kind: input, shape index: {}]
  %s2 = inlined_call_operand.hbm [shape: bf16[128,128], index: 2, kind: input, shape index: {}]
  %s3 = inlined_call_operand.vmem [shape: f32[1,128], index: 3, kind: input, shape index: {}]
  %s4 = inlined_call_operand.hbm [shape: bf16[8,128], index: 4, kind: output, shape index: {}]
  %s5 = sld [smem:[#allocation0]]
  $region46: #{tpu_custom_call.1} parent=0
    _
  %s7 = ssub.s32 1, %s5
  %s8 = scalar_select 0, %s7, %s5
  $region1: #{tpu_custom_call.1} parent=0
    #allocation3 [shape = 'u8[2048]{0}', space=vmem, size = 0x800, scoped, tag = 'input window, operand 0, single buffered']
    #allocation4 [shape = 's32[1]{0}', space=sflag, size = 0x4, scoped, tag = 'scoped memory for tpu_custom_call.1']
    #allocation5 [shape = 's32[1]{0}', space=sflag, size = 0x4, scoped, tag = 'scoped memory for tpu_custom_call.1']
    #allocation6 [shape = 'u8[32768]{0}', space=vmem, size = 0x8000, scoped, tag = 'input window, operand 1, single buffered']
    #allocation7 [shape = 's32[1]{0}', space=sflag, size = 0x4, scoped, tag = 'scoped memory for tpu_custom_call.1']
    #allocation8 [shape = 'u8[32768]{0}', space=vmem, size = 0x8000, scoped, tag = 'input window, operand 2, single buffered']
    #allocation9 [shape = 'u8[2048]{0}', space=vmem, size = 0x800, scoped, tag = 'output window, operand 0, single buffered']
    %9 = vsyncpa [#allocation4], 0
    %10 = vsyncpa [#allocation7], 0
    %11 = vsyncpa [#allocation5], 0
    // Predicated region
    $region2: #{tpu_custom_call.1} parent=1 // pred_check
      _
    $region3: #{tpu_custom_call.1} parent=1 // pred_check_branch
      %13 = sbr.rel (0) target = $region5
    $region4: #{tpu_custom_call.1} parent=1 // pred_region
      %s15 = ssub.s32 64, 64
      %16 = vsyncadd [#allocation4], %s15
      %s18 = sshll.u32 [#allocation3], 4
      %s19 = int_to_ptr.vmem [resolvable:$true] %s18
      %21 = dma.hbm_to_vmem [thread:$0]  %s0, 64, %s19, [#allocation4]
    $region5: #{tpu_custom_call.1} parent=1 // pred_fallthru
      _
    // Predicated region
    $region6: #{tpu_custom_call.1} parent=1 // pred_check
      _
    $region7: #{tpu_custom_call.1} parent=1 // pred_check_branch
      %23 = sbr.rel (0) target = $region9
    $region8: #{tpu_custom_call.1} parent=1 // pred_region
      %s25 = ssub.s32 1024, 1024
      %26 = vsyncadd [#allocation7], %s25
      %s27 = sshll.u32 [#allocation6], 4
      %s28 = int_to_ptr.vmem [resolvable:$true] %s27
      %33 = dma.hbm_to_vmem [thread:$0]  %s1, 1024, %s28, [#allocation7], 64, 64, 4
    $region9: #{tpu_custom_call.1} parent=1 // pred_fallthru
      _
    // Predicated region
    $region10: #{tpu_custom_call.1} parent=1 // pred_check
      _
    $region11: #{tpu_custom_call.1} parent=1 // pred_check_branch
      %35 = sbr.rel (0) target = $region13
    $region12: #{tpu_custom_call.1} parent=1 // pred_region
      %s37 = ssub.s32 1024, 1024
      %38 = vsyncadd [#allocation7], %s37
      %s39 = sshll.u32 [#allocation8], 4
      %s40 = int_to_ptr.vmem [resolvable:$true] %s39
      %45 = dma.hbm_to_vmem [thread:$0]  %s2, 1024, %s40, [#allocation7], 64, 64, 4
    $region13: #{tpu_custom_call.1} parent=1 // pred_fallthru
      _
    // Predicated region
    $region14: #{tpu_custom_call.1} parent=1 // pred_check
      _
    $region15: #{tpu_custom_call.1} parent=1 // pred_check_branch
      %47 = sbr.rel (0) target = $region17
    $region16: #{tpu_custom_call.1} parent=1 // pred_region
      _
    $region17: #{tpu_custom_call.1} parent=1 // pred_fallthru
      _
    // Predicated region
    $region18: #{tpu_custom_call.1} parent=1 // pred_check
      _
    $region19: #{tpu_custom_call.1} parent=1 // pred_check_branch
      %49 = sbr.rel (0) target = $region21
    $region20: #{tpu_custom_call.1} parent=1 // pred_region
      %50 = dma.done [#allocation4], 64
    $region21: #{tpu_custom_call.1} parent=1 // pred_fallthru
      _
    // Predicated region
    $region22: #{tpu_custom_call.1} parent=1 // pred_check
      _
    $region23: #{tpu_custom_call.1} parent=1 // pred_check_branch
      %52 = sbr.rel (0) target = $region25
    $region24: #{tpu_custom_call.1} parent=1 // pred_region
      %53 = dma.done [#allocation7], 1024
    $region25: #{tpu_custom_call.1} parent=1 // pred_fallthru
      _
    // Predicated region
    $region26: #{tpu_custom_call.1} parent=1 // pred_check
      _
    $region27: #{tpu_custom_call.1} parent=1 // pred_check_branch
      %55 = sbr.rel (0) target = $region29
    $region28: #{tpu_custom_call.1} parent=1 // pred_region
      %56 = dma.done [#allocation7], 1024
    $region29: #{tpu_custom_call.1} parent=1 // pred_fallthru
      _
    %p58 = scmp.eq.s32.totalorder 0, 0
    // Predicated region
    $region30: #{tpu_custom_call.1} parent=1 // pred_check
      %p59 = pneg %p58
    $region31: #{tpu_custom_call.1} parent=1 // pred_check_branch
      %61 = sbr.rel (%p59) target = $region33
    $region32: #{tpu_custom_call.1} parent=1 // pred_region
      %62 = vst [vmem:[#allocation2] sm:$0xff] 0.0
    $region33: #{tpu_custom_call.1} parent=1 // pred_fallthru
      _
    %v63 = vld [vmem:[#allocation2] sm:$0xff]
    %v64 = vld [vmem:[#allocation3] sm:$0xf]
    %v65 = vld [vmem:[#allocation6] sm:$0xf]
    %v66 = vld [vmem:[#allocation6 + $0x4] sm:$0xf]
    %v67 = vld [vmem:[#allocation6 + $0x8] sm:$0xf]
    %v68 = vld [vmem:[#allocation6 + $0xc] sm:$0xf]
    %v69 = vld [vmem:[#allocation6 + $0x10] sm:$0xf]
    %v70 = vld [vmem:[#allocation6 + $0x14] sm:$0xf]
    %v71 = vld [vmem:[#allocation6 + $0x18] sm:$0xf]
    %v72 = vld [vmem:[#allocation6 + $0x1c] sm:$0xf]
    %v73 = vld [vmem:[#allocation6 + $0x20] sm:$0xf]
    %v74 = vld [vmem:[#allocation6 + $0x24] sm:$0xf]
    %v75 = vld [vmem:[#allocation6 + $0x28] sm:$0xf]
    %v76 = vld [vmem:[#allocation6 + $0x2c] sm:$0xf]
    %v77 = vld [vmem:[#allocation6 + $0x30] sm:$0xf]
    %v78 = vld [vmem:[#allocation6 + $0x34] sm:$0xf]
    %v79 = vld [vmem:[#allocation6 + $0x38] sm:$0xf]
    %v80 = vld [vmem:[#allocation6 + $0x3c] sm:$0xf]
    %v97 = vunpack.c.l.b16 %v65
    %v98 = vunpack.c.l.b16 %v66
    %v99 = vunpack.c.l.b16 %v67
    %v100 = vunpack.c.l.b16 %v68
    %v101 = vunpack.c.l.b16 %v69
    %v102 = vunpack.c.l.b16 %v70
    %v103 = vunpack.c.l.b16 %v71
    %v104 = vunpack.c.l.b16 %v72
    %v105 = vunpack.c.l.b16 %v73
    %v106 = vunpack.c.l.b16 %v74
    %v107 = vunpack.c.l.b16 %v75
    %v108 = vunpack.c.l.b16 %v76
    %v109 = vunpack.c.l.b16 %v77
    %v110 = vunpack.c.l.b16 %v78
    %v111 = vunpack.c.l.b16 %v79
    %v112 = vunpack.c.l.b16 %v80
    %v113 = vpack.c.b16 %v98, %v97
    %v114 = vpack.c.b16 %v100, %v99
    %v115 = vpack.c.b16 %v102, %v101
    %v116 = vpack.c.b16 %v104, %v103
    %v117 = vpack.c.b16 %v106, %v105
    %v118 = vpack.c.b16 %v108, %v107
    %v119 = vpack.c.b16 %v110, %v109
    %v120 = vpack.c.b16 %v112, %v111
    %129 = vmatprep.subr.bf16.mxu0 0
    %130 = vmatpush1.bf16.msra.mxu0 %v113
    %131 = vmatprep.subr.bf16.mxu0 0
    %132 = vmatpush1.bf16.msra.mxu0 %v114
    %133 = vmatprep.subr.bf16.mxu0 0
    %134 = vmatpush1.bf16.msra.mxu0 %v115
    %135 = vmatprep.subr.bf16.mxu0 0
    %136 = vmatpush1.bf16.msra.mxu0 %v116
    %137 = vmatprep.subr.bf16.mxu0 0
    %138 = vmatpush1.bf16.msra.mxu0 %v117
    %139 = vmatprep.subr.bf16.mxu0 0
    %140 = vmatpush1.bf16.msra.mxu0 %v118
    %141 = vmatprep.subr.bf16.mxu0 0
    %142 = vmatpush1.bf16.msra.mxu0 %v119
    %143 = vmatprep.subr.bf16.mxu0 0
    %144 = vmatpush1.bf16.msra.mxu0 %v120
    %145 = vmatprep.subr.bf16.mxu0 0
    %146 = vmatpush1.bf16.msra.mxu0 0
    %147 = vmatprep.subr.bf16.mxu0 0
    %148 = vmatpush1.bf16.msra.mxu0 0
    %149 = vmatprep.subr.bf16.mxu0 0
    %150 = vmatpush1.bf16.msra.mxu0 0
    %151 = vmatprep.subr.bf16.mxu0 0
    %152 = vmatpush1.bf16.msra.mxu0 0
    %153 = vmatprep.subr.bf16.mxu0 0
    %154 = vmatpush1.bf16.msra.mxu0 0
    %155 = vmatprep.subr.bf16.mxu0 0
    %156 = vmatpush1.bf16.msra.mxu0 0
    %157 = vmatprep.subr.bf16.mxu0 0
    %158 = vmatpush1.bf16.msra.mxu0 0
    %159 = vmatprep.subr.bf16.mxu0 0
    %160 = vmatpush1.bf16.msra.mxu0 0
    %161 = vmatprep.mubr.bf16.mxu0 0
    %162 = vmatmul.mubr.bf16.gmra.mrb[0].mxu0 %v64
    %v163 = vpop.f32.mrb[0].mxu0
    %v164 = vadd.f32 0.0, %v163
    %v165 = vpop.f32.mrb[0].mxu0
    %v166 = vpop.f32.mrb[0].mxu0
    %v167 = vpop.f32.mrb[0].mxu0
    %168 = vdwg.mxu0
    %v169 = vadd.f32 %v63, %v164
    %170 = vst [vmem:[#allocation2] sm:$0xff] %v169
    // Predicated region
    $region34: #{tpu_custom_call.1} parent=1 // pred_check
      %p171 = pneg %p58
    $region35: #{tpu_custom_call.1} parent=1 // pred_check_branch
      %173 = sbr.rel (%p171) target = $region37
    $region36: #{tpu_custom_call.1} parent=1 // pred_region
      %v174 = vld [vmem:[#allocation2] sm:$0xff]
      %v175 = vpack.c.bf16 %v174, %v174
      %v176 = vld [vmem:[#allocation8] sm:$0xf]
      %v177 = vld [vmem:[#allocation8 + $0x4] sm:$0xf]
      %v178 = vld [vmem:[#allocation8 + $0x8] sm:$0xf]
      %v179 = vld [vmem:[#allocation8 + $0xc] sm:$0xf]
      %v180 = vld [vmem:[#allocation8 + $0x10] sm:$0xf]
      %v181 = vld [vmem:[#allocation8 + $0x14] sm:$0xf]
      %v182 = vld [vmem:[#allocation8 + $0x18] sm:$0xf]
      %v183 = vld [vmem:[#allocation8 + $0x1c] sm:$0xf]
      %v184 = vld [vmem:[#allocation8 + $0x20] sm:$0xf]
      %v185 = vld [vmem:[#allocation8 + $0x24] sm:$0xf]
      %v186 = vld [vmem:[#allocation8 + $0x28] sm:$0xf]
      %v187 = vld [vmem:[#allocation8 + $0x2c] sm:$0xf]
      %v188 = vld [vmem:[#allocation8 + $0x30] sm:$0xf]
      %v189 = vld [vmem:[#allocation8 + $0x34] sm:$0xf]
      %v190 = vld [vmem:[#allocation8 + $0x38] sm:$0xf]
      %v191 = vld [vmem:[#allocation8 + $0x3c] sm:$0xf]
      %v192 = vld [vmem:[%s3] sm:$0x1]
      %v194 = vlaneseq
      %v195 = vshrl.u32 %v194, 7
      %v196 = vsub.s32 0, %v195
      %v197 = vrot.slane %v192, %v196
      %v215 = vunpack.c.l.b16 %v176
      %v216 = vunpack.c.l.b16 %v177
      %v217 = vunpack.c.l.b16 %v178
      %v218 = vunpack.c.l.b16 %v179
      %v219 = vunpack.c.l.b16 %v180
      %v220 = vunpack.c.l.b16 %v181
      %v221 = vunpack.c.l.b16 %v182
      %v222 = vunpack.c.l.b16 %v183
      %v223 = vunpack.c.l.b16 %v184
      %v224 = vunpack.c.l.b16 %v185
      %v225 = vunpack.c.l.b16 %v186
      %v226 = vunpack.c.l.b16 %v187
      %v227 = vunpack.c.l.b16 %v188
      %v228 = vunpack.c.l.b16 %v189
      %v229 = vunpack.c.l.b16 %v190
      %v230 = vunpack.c.l.b16 %v191
      %v231 = vpack.c.b16 %v216, %v215
      %v232 = vpack.c.b16 %v218, %v217
      %v233 = vpack.c.b16 %v220, %v219
      %v234 = vpack.c.b16 %v222, %v221
      %v235 = vpack.c.b16 %v224, %v223
      %v236 = vpack.c.b16 %v226, %v225
      %v237 = vpack.c.b16 %v228, %v227
      %v238 = vpack.c.b16 %v230, %v229
      %247 = vmatprep.subr.bf16.mxu0 0
      %248 = vmatpush1.bf16.msra.mxu0 %v231
      %249 = vmatprep.subr.bf16.mxu0 0
      %250 = vmatpush1.bf16.msra.mxu0 %v232
      %251 = vmatprep.subr.bf16.mxu0 0
      %252 = vmatpush1.bf16.msra.mxu0 %v233
      %253 = vmatprep.subr.bf16.mxu0 0
      %254 = vmatpush1.bf16.msra.mxu0 %v234
      %255 = vmatprep.subr.bf16.mxu0 0
      %256 = vmatpush1.bf16.msra.mxu0 %v235
      %257 = vmatprep.subr.bf16.mxu0 0
      %258 = vmatpush1.bf16.msra.mxu0 %v236
      %259 = vmatprep.subr.bf16.mxu0 0
      %260 = vmatpush1.bf16.msra.mxu0 %v237
      %261 = vmatprep.subr.bf16.mxu0 0
      %262 = vmatpush1.bf16.msra.mxu0 %v238
      %263 = vmatprep.subr.bf16.mxu0 0
      %264 = vmatpush1.bf16.msra.mxu0 0
      %265 = vmatprep.subr.bf16.mxu0 0
      %266 = vmatpush1.bf16.msra.mxu0 0
      %267 = vmatprep.subr.bf16.mxu0 0
      %268 = vmatpush1.bf16.msra.mxu0 0
      %269 = vmatprep.subr.bf16.mxu0 0
      %270 = vmatpush1.bf16.msra.mxu0 0
      %271 = vmatprep.subr.bf16.mxu0 0
      %272 = vmatpush1.bf16.msra.mxu0 0
      %273 = vmatprep.subr.bf16.mxu0 0
      %274 = vmatpush1.bf16.msra.mxu0 0
      %275 = vmatprep.subr.bf16.mxu0 0
      %276 = vmatpush1.bf16.msra.mxu0 0
      %277 = vmatprep.subr.bf16.mxu0 0
      %278 = vmatpush1.bf16.msra.mxu0 0
      %279 = vmatprep.mubr.bf16.mxu0 0
      %280 = vmatmul.mubr.bf16.gmra.mrb[0].mxu0 %v175
      %v281 = vpop.f32.mrb[0].mxu0
      %v282 = vadd.f32 %v197, %v281
      %v283 = vpop.f32.mrb[0].mxu0
      %v284 = vpop.f32.mrb[0].mxu0
      %v285 = vpop.f32.mrb[0].mxu0
      %286 = vdwg.mxu0
      %v287 = vtanh.pop %v282
      %v288 = vpack.c.bf16 %v287, %v287
      %289 = vst [vmem:[#allocation9] sm:$0xf] %v288
    $region37: #{tpu_custom_call.1} parent=1 // pred_fallthru
      _
    // Predicated region
    $region38: #{tpu_custom_call.1} parent=1 // pred_check
      _
    $region39: #{tpu_custom_call.1} parent=1 // pred_check_branch
      %291 = sbr.rel (0) target = $region41
    $region40: #{tpu_custom_call.1} parent=1 // pred_region
      %s293 = ssub.s32 64, 64
      %294 = vsyncadd [#allocation5], %s293
      %s296 = sshll.u32 [#allocation9], 4
      %s297 = int_to_ptr.vmem [resolvable:$true] %s296
      %299 = dma.vmem_to_hbm [thread:$0]  %s297, 64, %s4, [#allocation5]
    $region41: #{tpu_custom_call.1} parent=1 // pred_fallthru
      _
    // Predicated region
    $region42: #{tpu_custom_call.1} parent=1 // pred_check
      _
    $region43: #{tpu_custom_call.1} parent=1 // pred_check_branch
      %301 = sbr.rel (0) target = $region45
    $region44: #{tpu_custom_call.1} parent=1 // pred_region
      %302 = dma.done [#allocation5], 64
    $region45: #{tpu_custom_call.1} parent=1 // pred_fallthru
      _
    %303 = vsyncpa [#allocation4], 1
    %304 = vsyncpa [#allocation7], 1
    %305 = vsyncpa [#allocation5], 1

// kernel: tpu_custom_call.1
$region0: #{tpu_custom_call.1}
  #allocation0 [shape = 'u32[]', space=smem, size = 0x4, offset = 0x4, fixed_abs, tag = 'smem constant byte address 0x4 - core index']
  #allocation1 [shape = 'u32[144,128]{1,0:T(1,128)}', space=vmem, size = 0x12000, scoped, tag = 'internal scratch']
  #allocation2 [shape = 'f32[8,128]{1,0:T(8,128)}', space=vmem, size = 0x1000, scoped, tag = 'scratch operand']
  %s0 = inlined_call_operand.hbm [shape: bf16[8,128], index: 0, kind: input, shape index: {}]
  %s1 = inlined_call_operand.hbm [shape: bf16[128,128], index: 1, kind: input, shape index: {}]
  %s2 = inlined_call_operand.hbm [shape: bf16[128,128], index: 2, kind: input, shape index: {}]
  %s3 = inlined_call_operand.vmem [shape: f32[1,128], index: 3, kind: input, shape index: {}]
  %s4 = inlined_call_operand.hbm [shape: bf16[8,128], index: 4, kind: output, shape index: {}]
  %s5 = sld [smem:[#allocation0]]
  $region46: #{tpu_custom_call.1} parent=0
    _
  %s7 = ssub.s32 1, %s5
  %s8 = scalar_select 0, %s7, %s5
  $region1: #{tpu_custom_call.1} parent=0
    #allocation3 [shape = 'u8[2048]{0}', space=vmem, size = 0x800, scoped, tag = 'input window, operand 0, single buffered']
    #allocation4 [shape = 's32[1]{0}', space=sflag, size = 0x4, scoped, tag = 'scoped memory for tpu_custom_call.1']
    #allocation5 [shape = 's32[1]{0}', space=sflag, size = 0x4, scoped, tag = 'scoped memory for tpu_custom_call.1']
    #allocation6 [shape = 'u8[32768]{0}', space=vmem, size = 0x8000, scoped, tag = 'input window, operand 1, single buffered']
    #allocation7 [shape = 's32[1]{0}', space=sflag, size = 0x4, scoped, tag = 'scoped memory for tpu_custom_call.1']
    #allocation8 [shape = 'u8[32768]{0}', space=vmem, size = 0x8000, scoped, tag = 'input window, operand 2, single buffered']
    #allocation9 [shape = 'u8[2048]{0}', space=vmem, size = 0x800, scoped, tag = 'output window, operand 0, single buffered']
    %9 = vsyncpa [#allocation4], 0
    %10 = vsyncpa [#allocation7], 0
    %11 = vsyncpa [#allocation5], 0
    // Predicated region
    $region2: #{tpu_custom_call.1} parent=1 // pred_check
      _
    $region3: #{tpu_custom_call.1} parent=1 // pred_check_branch
      %13 = sbr.rel (0) target = $region5
    $region4: #{tpu_custom_call.1} parent=1 // pred_region
      %s15 = ssub.s32 64, 64
      %16 = vsyncadd [#allocation4], %s15
      %s18 = sshll.u32 [#allocation3], 4
      %s19 = int_to_ptr.vmem [resolvable:$true] %s18
      %21 = dma.hbm_to_vmem [thread:$0]  %s0, 64, %s19, [#allocation4]
    $region5: #{tpu_custom_call.1} parent=1 // pred_fallthru
      _
    // Predicated region
    $region6: #{tpu_custom_call.1} parent=1 // pred_check
      _
    $region7: #{tpu_custom_call.1} parent=1 // pred_check_branch
      %23 = sbr.rel (0) target = $region9
    $region8: #{tpu_custom_call.1} parent=1 // pred_region
      %s25 = ssub.s32 1024, 1024
      %26 = vsyncadd [#allocation7], %s25
      %s27 = sshll.u32 [#allocation6], 4
      %s28 = int_to_ptr.vmem [resolvable:$true] %s27
      %33 = dma.hbm_to_vmem [thread:$0]  %s1, 1024, %s28, [#allocation7], 64, 64, 4
    $region9: #{tpu_custom_call.1} parent=1 // pred_fallthru
      _
    // Predicated region
    $region10: #{tpu_custom_call.1} parent=1 // pred_check
      _
    $region11: #{tpu_custom_call.1} parent=1 // pred_check_branch
      %35 = sbr.rel (0) target = $region13
    $region12: #{tpu_custom_call.1} parent=1 // pred_region
      %s37 = ssub.s32 1024, 1024
      %38 = vsyncadd [#allocation7], %s37
      %s39 = sshll.u32 [#allocation8], 4
      %s40 = int_to_ptr.vmem [resolvable:$true] %s39
      %45 = dma.hbm_to_vmem [thread:$0]  %s2, 1024, %s40, [#allocation7], 64, 64, 4
    $region13: #{tpu_custom_call.1} parent=1 // pred_fallthru
      _
    // Predicated region
    $region14: #{tpu_custom_call.1} parent=1 // pred_check
      _
    $region15: #{tpu_custom_call.1} parent=1 // pred_check_branch
      %47 = sbr.rel (0) target = $region17
    $region16: #{tpu_custom_call.1} parent=1 // pred_region
      _
    $region17: #{tpu_custom_call.1} parent=1 // pred_fallthru
      _
    // Predicated region
    $region18: #{tpu_custom_call.1} parent=1 // pred_check
      _
    $region19: #{tpu_custom_call.1} parent=1 // pred_check_branch
      %49 = sbr.rel (0) target = $region21
    $region20: #{tpu_custom_call.1} parent=1 // pred_region
      %50 = dma.done [#allocation4], 64
    $region21: #{tpu_custom_call.1} parent=1 // pred_fallthru
      _
    // Predicated region
    $region22: #{tpu_custom_call.1} parent=1 // pred_check
      _
    $region23: #{tpu_custom_call.1} parent=1 // pred_check_branch
      %52 = sbr.rel (0) target = $region25
    $region24: #{tpu_custom_call.1} parent=1 // pred_region
      %53 = dma.done [#allocation7], 1024
    $region25: #{tpu_custom_call.1} parent=1 // pred_fallthru
      _
    // Predicated region
    $region26: #{tpu_custom_call.1} parent=1 // pred_check
      _
    $region27: #{tpu_custom_call.1} parent=1 // pred_check_branch
      %55 = sbr.rel (0) target = $region29
    $region28: #{tpu_custom_call.1} parent=1 // pred_region
      %56 = dma.done [#allocation7], 1024
    $region29: #{tpu_custom_call.1} parent=1 // pred_fallthru
      _
    %p58 = scmp.eq.s32.totalorder 0, 0
    // Predicated region
    $region30: #{tpu_custom_call.1} parent=1 // pred_check
      %p59 = pneg %p58
    $region31: #{tpu_custom_call.1} parent=1 // pred_check_branch
      %61 = sbr.rel (%p59) target = $region33
    $region32: #{tpu_custom_call.1} parent=1 // pred_region
      %62 = vst [vmem:[#allocation2] sm:$0xff] 0.0
    $region33: #{tpu_custom_call.1} parent=1 // pred_fallthru
      _
    %v63 = vld [vmem:[#allocation2] sm:$0xff]
    %v64 = vld [vmem:[#allocation3] sm:$0xf]
    %v65 = vld [vmem:[#allocation6] sm:$0xf]
    %v66 = vld [vmem:[#allocation6 + $0x4] sm:$0xf]
    %v67 = vld [vmem:[#allocation6 + $0x8] sm:$0xf]
    %v68 = vld [vmem:[#allocation6 + $0xc] sm:$0xf]
    %v69 = vld [vmem:[#allocation6 + $0x10] sm:$0xf]
    %v70 = vld [vmem:[#allocation6 + $0x14] sm:$0xf]
    %v71 = vld [vmem:[#allocation6 + $0x18] sm:$0xf]
    %v72 = vld [vmem:[#allocation6 + $0x1c] sm:$0xf]
    %v73 = vld [vmem:[#allocation6 + $0x20] sm:$0xf]
    %v74 = vld [vmem:[#allocation6 + $0x24] sm:$0xf]
    %v75 = vld [vmem:[#allocation6 + $0x28] sm:$0xf]
    %v76 = vld [vmem:[#allocation6 + $0x2c] sm:$0xf]
    %v77 = vld [vmem:[#allocation6 + $0x30] sm:$0xf]
    %v78 = vld [vmem:[#allocation6 + $0x34] sm:$0xf]
    %v79 = vld [vmem:[#allocation6 + $0x38] sm:$0xf]
    %v80 = vld [vmem:[#allocation6 + $0x3c] sm:$0xf]
    %v97 = vunpack.c.l.b16 %v65
    %v98 = vunpack.c.l.b16 %v66
    %v99 = vunpack.c.l.b16 %v67
    %v100 = vunpack.c.l.b16 %v68
    %v101 = vunpack.c.l.b16 %v69
    %v102 = vunpack.c.l.b16 %v70
    %v103 = vunpack.c.l.b16 %v71
    %v104 = vunpack.c.l.b16 %v72
    %v105 = vunpack.c.l.b16 %v73
    %v106 = vunpack.c.l.b16 %v74
    %v107 = vunpack.c.l.b16 %v75
    %v108 = vunpack.c.l.b16 %v76
    %v109 = vunpack.c.l.b16 %v77
    %v110 = vunpack.c.l.b16 %v78
    %v111 = vunpack.c.l.b16 %v79
    %v112 = vunpack.c.l.b16 %v80
    %v113 = vpack.c.b16 %v98, %v97
    %v114 = vpack.c.b16 %v100, %v99
    %v115 = vpack.c.b16 %v102, %v101
    %v116 = vpack.c.b16 %v104, %v103
    %v117 = vpack.c.b16 %v106, %v105
    %v118 = vpack.c.b16 %v108, %v107
    %v119 = vpack.c.b16 %v110, %v109
    %v120 = vpack.c.b16 %v112, %v111
    %129 = vmatprep.subr.bf16.mxu0 0
    %130 = vmatpush1.bf16.msra.mxu0 %v113
    %131 = vmatprep.subr.bf16.mxu0 0
    %132 = vmatpush1.bf16.msra.mxu0 %v114
    %133 = vmatprep.subr.bf16.mxu0 0
    %134 = vmatpush1.bf16.msra.mxu0 %v115
    %135 = vmatprep.subr.bf16.mxu0 0
    %136 = vmatpush1.bf16.msra.mxu0 %v116
    %137 = vmatprep.subr.bf16.mxu0 0
    %138 = vmatpush1.bf16.msra.mxu0 %v117
    %139 = vmatprep.subr.bf16.mxu0 0
    %140 = vmatpush1.bf16.msra.mxu0 %v118
    %141 = vmatprep.subr.bf16.mxu0 0
    %142 = vmatpush1.bf16.msra.mxu0 %v119
    %143 = vmatprep.subr.bf16.mxu0 0
    %144 = vmatpush1.bf16.msra.mxu0 %v120
    %145 = vmatprep.subr.bf16.mxu0 0
    %146 = vmatpush1.bf16.msra.mxu0 0
    %147 = vmatprep.subr.bf16.mxu0 0
    %148 = vmatpush1.bf16.msra.mxu0 0
    %149 = vmatprep.subr.bf16.mxu0 0
    %150 = vmatpush1.bf16.msra.mxu0 0
    %151 = vmatprep.subr.bf16.mxu0 0
    %152 = vmatpush1.bf16.msra.mxu0 0
    %153 = vmatprep.subr.bf16.mxu0 0
    %154 = vmatpush1.bf16.msra.mxu0 0
    %155 = vmatprep.subr.bf16.mxu0 0
    %156 = vmatpush1.bf16.msra.mxu0 0
    %157 = vmatprep.subr.bf16.mxu0 0
    %158 = vmatpush1.bf16.msra.mxu0 0
    %159 = vmatprep.subr.bf16.mxu0 0
    %160 = vmatpush1.bf16.msra.mxu0 0
    %161 = vmatprep.mubr.bf16.mxu0 0
    %162 = vmatmul.mubr.bf16.gmra.mrb[0].mxu0 %v64
    %v163 = vpop.f32.mrb[0].mxu0
    %v164 = vadd.f32 0.0, %v163
    %v165 = vpop.f32.mrb[0].mxu0
    %v166 = vpop.f32.mrb[0].mxu0
    %v167 = vpop.f32.mrb[0].mxu0
    %168 = vdwg.mxu0
    %v169 = vadd.f32 %v63, %v164
    %170 = vst [vmem:[#allocation2] sm:$0xff] %v169
    // Predicated region
    $region34: #{tpu_custom_call.1} parent=1 // pred_check
      %p171 = pneg %p58
    $region35: #{tpu_custom_call.1} parent=1 // pred_check_branch
      %173 = sbr.rel (%p171) target = $region37
    $region36: #{tpu_custom_call.1} parent=1 // pred_region
      %v174 = vld [vmem:[#allocation2] sm:$0xff]
      %v175 = vpack.c.bf16 %v174, %v174
      %v176 = vld [vmem:[#allocation8] sm:$0xf]
      %v177 = vld [vmem:[#allocation8 + $0x4] sm:$0xf]
      %v178 = vld [vmem:[#allocation8 + $0x8] sm:$0xf]
      %v179 = vld [vmem:[#allocation8 + $0xc] sm:$0xf]
      %v180 = vld [vmem:[#allocation8 + $0x10] sm:$0xf]
      %v181 = vld [vmem:[#allocation8 + $0x14] sm:$0xf]
      %v182 = vld [vmem:[#allocation8 + $0x18] sm:$0xf]
      %v183 = vld [vmem:[#allocation8 + $0x1c] sm:$0xf]
      %v184 = vld [vmem:[#allocation8 + $0x20] sm:$0xf]
      %v185 = vld [vmem:[#allocation8 + $0x24] sm:$0xf]
      %v186 = vld [vmem:[#allocation8 + $0x28] sm:$0xf]
      %v187 = vld [vmem:[#allocation8 + $0x2c] sm:$0xf]
      %v188 = vld [vmem:[#allocation8 + $0x30] sm:$0xf]
      %v189 = vld [vmem:[#allocation8 + $0x34] sm:$0xf]
      %v190 = vld [vmem:[#allocation8 + $0x38] sm:$0xf]
      %v191 = vld [vmem:[#allocation8 + $0x3c] sm:$0xf]
      %v192 = vld [vmem:[%s3] sm:$0x1]
      %v194 = vlaneseq
      %v195 = vshrl.u32 %v194, 7
      %v196 = vsub.s32 0, %v195
      %v197 = vrot.slane %v192, %v196
      %v215 = vunpack.c.l.b16 %v176
      %v216 = vunpack.c.l.b16 %v177
      %v217 = vunpack.c.l.b16 %v178
      %v218 = vunpack.c.l.b16 %v179
      %v219 = vunpack.c.l.b16 %v180
      %v220 = vunpack.c.l.b16 %v181
      %v221 = vunpack.c.l.b16 %v182
      %v222 = vunpack.c.l.b16 %v183
      %v223 = vunpack.c.l.b16 %v184
      %v224 = vunpack.c.l.b16 %v185
      %v225 = vunpack.c.l.b16 %v186
      %v226 = vunpack.c.l.b16 %v187
      %v227 = vunpack.c.l.b16 %v188
      %v228 = vunpack.c.l.b16 %v189
      %v229 = vunpack.c.l.b16 %v190
      %v230 = vunpack.c.l.b16 %v191
      %v231 = vpack.c.b16 %v216, %v215
      %v232 = vpack.c.b16 %v218, %v217
      %v233 = vpack.c.b16 %v220, %v219
      %v234 = vpack.c.b16 %v222, %v221
      %v235 = vpack.c.b16 %v224, %v223
      %v236 = vpack.c.b16 %v226, %v225
      %v237 = vpack.c.b16 %v228, %v227
      %v238 = vpack.c.b16 %v230, %v229
      %247 = vmatprep.subr.bf16.mxu0 0
      %248 = vmatpush1.bf16.msra.mxu0 %v231
      %249 = vmatprep.subr.bf16.mxu0 0
      %250 = vmatpush1.bf16.msra.mxu0 %v232
      %251 = vmatprep.subr.bf16.mxu0 0
      %252 = vmatpush1.bf16.msra.mxu0 %v233
      %253 = vmatprep.subr.bf16.mxu0 0
      %254 = vmatpush1.bf16.msra.mxu0 %v234
      %255 = vmatprep.subr.bf16.mxu0 0
      %256 = vmatpush1.bf16.msra.mxu0 %v235
      %257 = vmatprep.subr.bf16.mxu0 0
      %258 = vmatpush1.bf16.msra.mxu0 %v236
      %259 = vmatprep.subr.bf16.mxu0 0
      %260 = vmatpush1.bf16.msra.mxu0 %v237
      %261 = vmatprep.subr.bf16.mxu0 0
      %262 = vmatpush1.bf16.msra.mxu0 %v238
      %263 = vmatprep.subr.bf16.mxu0 0
      %264 = vmatpush1.bf16.msra.mxu0 0
      %265 = vmatprep.subr.bf16.mxu0 0
      %266 = vmatpush1.bf16.msra.mxu0 0
      %267 = vmatprep.subr.bf16.mxu0 0
      %268 = vmatpush1.bf16.msra.mxu0 0
      %269 = vmatprep.subr.bf16.mxu0 0
      %270 = vmatpush1.bf16.msra.mxu0 0
      %271 = vmatprep.subr.bf16.mxu0 0
      %272 = vmatpush1.bf16.msra.mxu0 0
      %273 = vmatprep.subr.bf16.mxu0 0
      %274 = vmatpush1.bf16.msra.mxu0 0
      %275 = vmatprep.subr.bf16.mxu0 0
      %276 = vmatpush1.bf16.msra.mxu0 0
      %277 = vmatprep.subr.bf16.mxu0 0
      %278 = vmatpush1.bf16.msra.mxu0 0
      %279 = vmatprep.mubr.bf16.mxu0 0
      %280 = vmatmul.mubr.bf16.gmra.mrb[0].mxu0 %v175
      %v281 = vpop.f32.mrb[0].mxu0
      %v282 = vadd.f32 %v197, %v281
      %v283 = vpop.f32.mrb[0].mxu0
      %v284 = vpop.f32.mrb[0].mxu0
      %v285 = vpop.f32.mrb[0].mxu0
      %286 = vdwg.mxu0
      %v287 = vtanh.pop %v282
      %v288 = vpack.c.bf16 %v287, %v287
      %289 = vst [vmem:[#allocation9] sm:$0xf] %v288
    $region37: #{tpu_custom_call.1} parent=1 // pred_fallthru
      _
    // Predicated region
    $region38: #{tpu_custom_call.1} parent=1 // pred_check
      _
    $region39: #{tpu_custom_call.1} parent=1 // pred_check_branch
      %291 = sbr.rel (0) target = $region41
    $region40: #{tpu_custom_call.1} parent=1 // pred_region
      %s293 = ssub.s32 64, 64
      %294 = vsyncadd [#allocation5], %s293
      %s296 = sshll.u32 [#allocation9], 4
      %s297 = int_to_ptr.vmem [resolvable:$true] %s296
      %299 = dma.vmem_to_hbm [thread:$0]  %s297, 64, %s4, [#allocation5]
    $region41: #{tpu_custom_call.1} parent=1 // pred_fallthru
      _
    // Predicated region
    $region42: #{tpu_custom_call.1} parent=1 // pred_check
      _
    $region43: #{tpu_custom_call.1} parent=1 // pred_check_branch
      %301 = sbr.rel (0) target = $region45
    $region44: #{tpu_custom_call.1} parent=1 // pred_region
      %302 = dma.done [#allocation5], 64
    $region45: #{tpu_custom_call.1} parent=1 // pred_fallthru
      _
    %303 = vsyncpa [#allocation4], 1
    %304 = vsyncpa [#allocation7], 1
    %305 = vsyncpa [#allocation5], 1

</llo_original>
